<compile_context>
chip_gen: v5e
topology: v5e:2x2
jax: 0.10.0
libtpu: 0.0.40
codegen_flags: <defaults>
</compile_context>

<pallas_src>
import jax
import jax.numpy as jnp
from jax.experimental import pallas as pl
from jax.experimental.pallas import tpu as pltpu

LANES = 128          # lane width of a vreg
MAX_ROW_TILE = 1024  # rows of 128 lanes per grid step (~1 MiB f32 input tile)


def _linear_sigmoid_kernel(params_ref, x_ref, o_ref):
    # params_ref: (3,) f32 in SMEM -> [w0, w1, bias]
    # x_ref:      (2, TR, 128) f32 in VMEM (feature-major, batch on rows/lanes)
    # o_ref:      (TR, 128) f32 in VMEM (lane-dense output)
    w0 = params_ref[0]
    w1 = params_ref[1]
    b = params_ref[2]
    x0 = x_ref[0]                      # (TR, 128)
    x1 = x_ref[1]                      # (TR, 128)
    z = x0 * w0 + x1 * w1 + b          # two scalar-vector FMAs on the VPU
    # sigmoid(z) = 1 / (1 + exp(-z)); exp and approx reciprocal both on the EUP.
    o_ref[...] = pl.reciprocal(1.0 + jnp.exp(-z), approx=True)


def text_model_forward(x, weight, bias):
    """x: (B, 2) f32; weight: (1, 2) f32; bias: (1,) f32 -> (B, 1) f32."""
    B, f_in = x.shape
    assert f_in == 2 and weight.shape == (1, 2) and bias.shape == (1,)

    # Map batch -> (rows, lanes) so both sublanes and lanes are dense.
    rows = pl.cdiv(B, LANES)
    row_tile = rows if rows <= MAX_ROW_TILE else MAX_ROW_TILE
    rows_p = pl.cdiv(rows, row_tile) * row_tile
    b_pad = rows_p * LANES

    # Layout plumbing in the wrapper (outside the kernel): pad + transpose so
    # the feature dim (2) leads and batch fills the last two (tiled) dims.
    xp = jnp.pad(x.astype(jnp.float32), ((0, b_pad - B), (0, 0)))
    x_t = xp.T.reshape(2, rows_p, LANES)                           # (2, Rp, 128)

    # Weight + bias as three scalars in a single SMEM block.
    params = jnp.concatenate(
        [weight.reshape(-1), bias.reshape(-1)]).astype(jnp.float32)  # (3,)

    out = pl.pallas_call(
        _linear_sigmoid_kernel,
        out_shape=jax.ShapeDtypeStruct((rows_p, LANES), jnp.float32),
        grid=(rows_p // row_tile,),
        in_specs=[
            pl.BlockSpec(memory_space=pltpu.MemorySpace.SMEM),        # params
            pl.BlockSpec((2, row_tile, LANES), lambda i: (0, i, 0)),  # x
        ],
        out_specs=pl.BlockSpec((row_tile, LANES), lambda i: (i, 0)),
        compiler_params=pltpu.CompilerParams(
            dimension_semantics=("parallel",),
        ),
    )(params, x_t)

    # Undo the layout plumbing: (Rp, 128) -> (B, 1).
    return out.reshape(b_pad)[:B].reshape(B, 1)


def _reference(x, weight, bias):
    return jax.nn.sigmoid(x @ weight.T + bias)


if __name__ == "__main__":
    key = jax.random.PRNGKey(0)
    k_x, k_w, k_b, k_x2 = jax.random.split(key, 4)

    in_features, out_features = 2, 1

    # Deterministic "PyTorch-style" init: U(-1/sqrt(in), 1/sqrt(in)).
    bound = 1.0 / jnp.sqrt(jnp.float32(in_features))
    weight = jax.random.uniform(k_w, (out_features, in_features),
                                jnp.float32, -bound, bound)
    bias = jax.random.uniform(k_b, (out_features,), jnp.float32, -bound, bound)

    # Small shape consistent with the module: [batch_size, max_len] = [8, 2].
    batch = 8
    x = jax.random.normal(k_x, (batch, in_features), jnp.float32)
    out = text_model_forward(x, weight, bias)
    jax.block_until_ready(out)
    ref = _reference(x, weight, bias)
    assert out.shape == (batch, out_features)
    # approx reciprocal (EUP) -> slightly looser tolerance than exact divide.
    assert jnp.allclose(out, ref, atol=2e-3, rtol=2e-3)

    # Second check exercising multiple batch rows + tail padding (B > 128).
    batch2 = 200
    x2 = jax.random.normal(k_x2, (batch2, in_features), jnp.float32)
    out2 = text_model_forward(x2, weight, bias)
    jax.block_until_ready(out2)
    ref2 = _reference(x2, weight, bias)
    assert out2.shape == (batch2, out_features)
    assert jnp.allclose(out2, ref2, atol=2e-3, rtol=2e-3)

    print("KERNEL_OK")
</pallas_src>

<mosaic_0001>
module attributes {stable_mosaic.version = 11 : i64} {
  func.func @_linear_sigmoid_kernel(%arg0: i32, %arg1: memref<3xf32, #tpu.memory_space<smem>>, %arg2: memref<2x1x128xf32, #tpu.memory_space<vmem>>, %arg3: memref<1x128xf32, #tpu.memory_space<vmem>>) attributes {dimension_semantics = [#tpu.dimension_semantics<parallel>], iteration_bounds = array<i64: 1>, scalar_prefetch = 0 : i64, scratch_operands = 0 : i64, tpu.core_type = #tpu.core_type<tc>, window_params = [{transform_indices = @transform_0, window_bounds = array<i64: 3>}, {transform_indices = @transform_1, window_bounds = array<i64: 2, 1, 128>}, {transform_indices = @transform_2, window_bounds = array<i64: 1, 128>}]} {
    %c0 = arith.constant 0 : index
    %0 = memref.load %arg1[%c0] : memref<3xf32, #tpu.memory_space<smem>>
    %c1 = arith.constant 1 : index
    %1 = memref.load %arg1[%c1] : memref<3xf32, #tpu.memory_space<smem>>
    %c2 = arith.constant 2 : index
    %2 = memref.load %arg1[%c2] : memref<3xf32, #tpu.memory_space<smem>>
    %c0_0 = arith.constant 0 : index
    %c0_1 = arith.constant 0 : index
    %c0_2 = arith.constant 0 : index
    %3 = vector.load %arg2[%c0_0, %c0_1, %c0_2] : memref<2x1x128xf32, #tpu.memory_space<vmem>>, vector<1x1x128xf32>
    %4 = vector.shape_cast %3 : vector<1x1x128xf32> to vector<1x128xf32>
    %c1_3 = arith.constant 1 : index
    %c0_4 = arith.constant 0 : index
    %c0_5 = arith.constant 0 : index
    %5 = vector.load %arg2[%c1_3, %c0_4, %c0_5] : memref<2x1x128xf32, #tpu.memory_space<vmem>>, vector<1x1x128xf32>
    %6 = vector.shape_cast %5 : vector<1x1x128xf32> to vector<1x128xf32>
    %7 = vector.broadcast %0 : f32 to vector<1x128xf32>
    %8 = arith.mulf %4, %7 : vector<1x128xf32>
    %9 = vector.broadcast %1 : f32 to vector<1x128xf32>
    %10 = arith.mulf %6, %9 : vector<1x128xf32>
    %11 = arith.addf %8, %10 : vector<1x128xf32>
    %12 = vector.broadcast %2 : f32 to vector<1x128xf32>
    %13 = arith.addf %11, %12 : vector<1x128xf32>
    %cst = arith.constant 0.000000e+00 : f32
    %14 = vector.broadcast %cst : f32 to vector<1x128xf32>
    %15 = arith.subf %14, %13 : vector<1x128xf32>
    %16 = math.exp %15 : vector<1x128xf32>
    %cst_6 = arith.constant 1.000000e+00 : f32
    %17 = vector.broadcast %cst_6 : f32 to vector<1x128xf32>
    %18 = arith.addf %17, %16 : vector<1x128xf32>
    %19 = tpu.reciprocal %18 {approx = true} : vector<1x128xf32> -> vector<1x128xf32>
    %c0_7 = arith.constant 0 : index
    %c0_8 = arith.constant 0 : index
    %20 = vector.load %arg3[%c0_7, %c0_8] : memref<1x128xf32, #tpu.memory_space<vmem>>, vector<1x128xf32>
    tpu.vector_store %arg3[%c0_7, %c0_8], %19 {strides = array<i32>} : memref<1x128xf32, #tpu.memory_space<vmem>>, vector<1x128xf32>,
    return
  }
  func.func @transform_0(%arg0: i32) -> i32 {
    %c0_i32 = arith.constant 0 : i32
    %c0_i32_0 = arith.constant 0 : i32
    return %c0_i32 : i32
  }
  func.func @transform_1(%arg0: i32) -> (i32, i32, i32) {
    %c0_i32 = arith.constant 0 : i32
    %c0_i32_0 = arith.constant 0 : i32
    %c0_i32_1 = arith.constant 0 : i32
    return %c0_i32, %arg0, %c0_i32_0 : i32, i32, i32
  }
  func.func @transform_2(%arg0: i32) -> (i32, i32) {
    %c0_i32 = arith.constant 0 : i32
    %c0_i32_0 = arith.constant 0 : i32
    return %arg0, %c0_i32 : i32, i32
  }
}

</mosaic_0001>

<llo_original>
// kernel: tpu_custom_call.1
$region0: #{tpu_custom_call.1}
  #allocation0 [shape = 'u32[]', space=smem, size = 0x4, offset = 0x4, fixed_abs, tag = 'smem constant byte address 0x4 - core index']
  #allocation1 [shape = 'u32[72,128]{1,0:T(1,128)}', space=vmem, size = 0x9000, scoped, tag = 'internal scratch']
  %s0 = inlined_call_operand.hbm [shape: f32[3], index: 0, kind: input, shape index: {}]
  %s1 = inlined_call_operand.hbm [shape: f32[2,1,128], index: 1, kind: input, shape index: {}]
  %s2 = inlined_call_operand.hbm [shape: f32[1,128], index: 2, kind: output, shape index: {}]
  %s3 = sld [smem:[#allocation0]]
  $region26: #{tpu_custom_call.1} parent=0
    _
  %s5 = ssub.s32 1, %s3
  %s6 = scalar_select 0, %s5, %s3
  $region1: #{tpu_custom_call.1} parent=0
    #allocation2 [shape = 'u8[512]{0}', space=smem, size = 0x200, scoped, tag = 'input window, operand 0, single buffered']
    #allocation3 [shape = 's32[1]{0}', space=sflag, size = 0x4, scoped, tag = 'scoped memory for tpu_custom_call.1']
    #allocation4 [shape = 's32[1]{0}', space=sflag, size = 0x4, scoped, tag = 'scoped memory for tpu_custom_call.1']
    #allocation5 [shape = 's32[1]{0}', space=sflag, size = 0x4, scoped, tag = 'scoped memory for tpu_custom_call.1']
    #allocation6 [shape = 'u8[1024]{0}', space=vmem, size = 0x400, scoped, tag = 'input window, operand 1, single buffered']
    #allocation7 [shape = 'u8[512]{0}', space=vmem, size = 0x400, scoped, tag = 'output window, operand 0, single buffered']
    %7 = vsyncpa [#allocation5], 0
    %8 = vsyncpa [#allocation3], 0
    %9 = vsyncpa [#allocation4], 0
    // Predicated region
    $region2: #{tpu_custom_call.1} parent=1 // pred_check
      _
    $region3: #{tpu_custom_call.1} parent=1 // pred_check_branch
      %11 = sbr.rel (0) target = $region5
    $region4: #{tpu_custom_call.1} parent=1 // pred_region
      %13 = vsyncadd [#allocation5], 0
      %s15 = sshll.u32 %s0, 4
      %s16 = int_to_ptr.hbm [resolvable:$true] %s15
      %18 = dma.hbm_to_smem %s16, 16, [#allocation2], [#allocation5]
    $region5: #{tpu_custom_call.1} parent=1 // pred_fallthru
      _
    // Predicated region
    $region6: #{tpu_custom_call.1} parent=1 // pred_check
      _
    $region7: #{tpu_custom_call.1} parent=1 // pred_check_branch
      %20 = sbr.rel (0) target = $region9
    $region8: #{tpu_custom_call.1} parent=1 // pred_region
      %22 = vsyncadd [#allocation3], 0
      %s23 = sshll.u32 %s1, 4
      %s24 = int_to_ptr.hbm [resolvable:$true] %s23
      %s25 = sshll.u32 [#allocation6], 4
      %s26 = int_to_ptr.vmem [resolvable:$true] %s25
      %31 = dma.hbm_to_vmem [thread:$0]  %s24, 32, %s26, [#allocation3], 16, 16, 1
    $region9: #{tpu_custom_call.1} parent=1 // pred_fallthru
      _
    // Predicated region
    $region10: #{tpu_custom_call.1} parent=1 // pred_check
      _
    $region11: #{tpu_custom_call.1} parent=1 // pred_check_branch
      %33 = sbr.rel (0) target = $region13
    $region12: #{tpu_custom_call.1} parent=1 // pred_region
      %35 = dma.done [#allocation5], 16
    $region13: #{tpu_custom_call.1} parent=1 // pred_fallthru
      _
    // Predicated region
    $region14: #{tpu_custom_call.1} parent=1 // pred_check
      _
    $region15: #{tpu_custom_call.1} parent=1 // pred_check_branch
      %37 = sbr.rel (0) target = $region17
    $region16: #{tpu_custom_call.1} parent=1 // pred_region
      %39 = dma.done [#allocation3], 32
    $region17: #{tpu_custom_call.1} parent=1 // pred_fallthru
      _
    %40 = sfence
    %s41 = sld [smem:[#allocation2]]
    %s42 = sld [smem:[#allocation2 + $0x1]]
    %s43 = sld [smem:[#allocation2 + $0x2]]
    %v44 = vld [vmem:[#allocation6] sm:$0x1]
    %s45 = scalar_lea.vmem [#allocation6], 1
    %v46 = vld [vmem:[%s45] sm:$0x1]
    %v47 = vstv %s41
    %v48 = vmul.f32 %v44, %v47
    %v49 = vstv %s42
    %v50 = vmul.f32 %v46, %v49
    %v51 = vadd.f32 %v48, %v50
    %v52 = vstv %s43
    %v53 = vadd.f32 %v51, %v52
    %v54 = vsub.f32 0.0, %v53
    %v55 = vmul.f32 %v54, 1.442695
    %v56 = vpow.pop %v55
    %v57 = vadd.f32 %v56, 1.0
    %v58 = vrcp.pop %v57
    %59 = vst [vmem:[#allocation7] sm:$0x1] %v58
    // Predicated region
    $region18: #{tpu_custom_call.1} parent=1 // pred_check
      _
    $region19: #{tpu_custom_call.1} parent=1 // pred_check_branch
      %61 = sbr.rel (0) target = $region21
    $region20: #{tpu_custom_call.1} parent=1 // pred_region
      %63 = vsyncadd [#allocation4], 0
      %s65 = sshll.u32 [#allocation7], 4
      %s66 = int_to_ptr.vmem [resolvable:$true] %s65
      %s67 = sshll.u32 %s2, 4
      %s68 = int_to_ptr.hbm [resolvable:$true] %s67
      %70 = dma.vmem_to_hbm [thread:$0]  %s66, 16, %s68, [#allocation4]
    $region21: #{tpu_custom_call.1} parent=1 // pred_fallthru
      _
    // Predicated region
    $region22: #{tpu_custom_call.1} parent=1 // pred_check
      _
    $region23: #{tpu_custom_call.1} parent=1 // pred_check_branch
      %72 = sbr.rel (0) target = $region25
    $region24: #{tpu_custom_call.1} parent=1 // pred_region
      %74 = dma.done [#allocation4], 16
    $region25: #{tpu_custom_call.1} parent=1 // pred_fallthru
      _
    %75 = vsyncpa [#allocation3], 1
    %76 = vsyncpa [#allocation4], 1
    %77 = vsyncpa [#allocation5], 1

</llo_original>
